<compile_context>
chip_gen: v5e
topology: v5e:2x2
jax: 0.10.0
libtpu: 0.0.40
codegen_flags: <defaults>
</compile_context>

<pallas_src>
import jax
import jax.numpy as jnp
from jax.experimental import pallas as pl
from jax.experimental.pallas import tpu as pltpu

hidden_size = 128
input_size = 28
num_classes = 10
num_layers = 2

D_PAD = 128   # input features padded to one lane tile
C_PAD = 128   # class dim padded to one lane tile (lane-dense final store)


def rnn_kernel(x_ref, w1_ref, b1_ref, w2_ref, b2_ref, wf_ref, bf_ref, out_ref):
    """Single-invocation 2-layer tanh RNN + final FC.

    x_ref : (T, B, D_PAD)     time-major, feature-padded input
    w1_ref: (D_PAD + H, H)    fused [W_ih_l0.T ; W_hh_l0.T] (zero rows under pad)
    w2_ref: (2H, H)           fused [W_ih_l1.T ; W_hh_l1.T]
    wf_ref: (H, C_PAD)        fc.weight.T, class-dim padded
    out   : (B, C_PAD)
    """
    T, B, _ = x_ref.shape
    H = hidden_size

    # Load weights once (they stay resident in vregs/VMEM for the whole loop).
    w1 = w1_ref[...]
    b1 = b1_ref[...]
    w2 = w2_ref[...]
    b2 = b2_ref[...]

    h1 = jnp.zeros((B, H), jnp.float32)
    h2 = jnp.zeros((B, H), jnp.float32)

    # Statically unrolled time loop: one fused MXU matmul per layer per step.
    for t in range(T):
        xt = x_ref[t]                                    # (B, D_PAD)
        xh = jnp.concatenate([xt, h1], axis=-1)          # (B, D_PAD + H) = (B, 256)
        h1 = jnp.tanh(
            jnp.dot(xh, w1, preferred_element_type=jnp.float32) + b1)
        hh = jnp.concatenate([h1, h2], axis=-1)          # (B, 2H) = (B, 256)
        h2 = jnp.tanh(
            jnp.dot(hh, w2, preferred_element_type=jnp.float32) + b2)

    # Final FC on the last hidden state only; lane-dense (B, 128) store.
    out_ref[...] = (
        jnp.dot(h2, wf_ref[...], preferred_element_type=jnp.float32)
        + bf_ref[...]
    ).astype(out_ref.dtype)


def rnn_forward(x, params):
    """x: (B, T, input_size) float32, batch_first like the PyTorch module."""
    B, T, D = x.shape

    w1, b1, w2, b2, wf_p, bf_p = params   # pre-fused / pre-padded weights

    # Time-major layout + pad features to one lane tile (zeros hit zero rows
    # of the fused w1, so the result is unchanged).
    x_tm = jnp.transpose(x, (1, 0, 2))                        # (T, B, D)
    x_tm = jnp.pad(x_tm, ((0, 0), (0, 0), (0, D_PAD - D)))    # (T, B, D_PAD)

    # Single kernel invocation; everything (x, weights, output) fits trivially
    # in VMEM (~0.4 MiB total).
    # TODO(synk): for large batches, add a leading "parallel" batch-chunk grid
    # axis so both v7x TensorCores run independent shards.
    out = pl.pallas_call(
        rnn_kernel,
        out_shape=jax.ShapeDtypeStruct((B, C_PAD), jnp.float32),
        in_specs=[pl.BlockSpec(memory_space=pltpu.MemorySpace.VMEM)] * 7,
        out_specs=pl.BlockSpec(memory_space=pltpu.MemorySpace.VMEM),
    )(x_tm, w1, b1, w2, b2, wf_p, bf_p)

    return out[:, :num_classes]


def init_raw_params(key):
    """Deterministic init matching PyTorch parameter shapes (pre-transposed)."""
    H, D, C = hidden_size, input_size, num_classes
    k = 1.0 / jnp.sqrt(H)
    keys = jax.random.split(key, 10)
    u = lambda kk, shape: jax.random.uniform(kk, shape, jnp.float32, -k, k)

    w1i = u(keys[0], (D, H))                         # weight_ih_l0.T
    w1h = u(keys[1], (H, H))                         # weight_hh_l0.T
    b1 = u(keys[2], (1, H)) + u(keys[3], (1, H))     # b_ih_l0 + b_hh_l0
    w2i = u(keys[4], (H, H))                         # weight_ih_l1.T
    w2h = u(keys[5], (H, H))                         # weight_hh_l1.T
    b2 = u(keys[6], (1, H)) + u(keys[7], (1, H))     # b_ih_l1 + b_hh_l1
    wf = u(keys[8], (H, C))                          # fc.weight.T
    bf = u(keys[9], (1, C))                          # fc.bias
    return (w1i, w1h, b1, w2i, w2h, b2, wf, bf)


def pack_params(raw):
    """Fuse input/hidden weights per layer and pad to lane-aligned shapes."""
    w1i, w1h, b1, w2i, w2h, b2, wf, bf = raw
    H, D, C = hidden_size, input_size, num_classes

    w1 = jnp.zeros((D_PAD + H, H), jnp.float32)
    w1 = w1.at[:D, :].set(w1i).at[D_PAD:, :].set(w1h)        # (256, H)
    w2 = jnp.concatenate([w2i, w2h], axis=0)                 # (256, H)
    wf_p = jnp.zeros((H, C_PAD), jnp.float32).at[:, :C].set(wf)
    bf_p = jnp.zeros((1, C_PAD), jnp.float32).at[:, :C].set(bf)
    return (w1, b1, w2, b2, wf_p, bf_p)


def rnn_reference(x, raw):
    """Pure-JAX reference (unfused weights) for sanity checking."""
    w1i, w1h, b1, w2i, w2h, b2, wf, bf = raw
    B, T, D = x.shape
    h1 = jnp.zeros((B, hidden_size), jnp.float32)
    h2 = jnp.zeros((B, hidden_size), jnp.float32)
    for t in range(T):
        xt = x[:, t, :]
        h1 = jnp.tanh(xt @ w1i + h1 @ w1h + b1)
        h2 = jnp.tanh(h1 @ w2i + h2 @ w2h + b2)
    return h2 @ wf + bf


if __name__ == "__main__":
    key = jax.random.PRNGKey(0)
    kx, kp = jax.random.split(key)

    B, T = 2, 8
    x = jax.random.normal(kx, (B, T, input_size), jnp.float32)

    raw = init_raw_params(kp)
    params = pack_params(raw)

    out = jax.block_until_ready(rnn_forward(x, params))
    ref = rnn_reference(x, raw)

    assert out.shape == (B, num_classes)
    assert jnp.allclose(out, ref, atol=1e-4, rtol=1e-4), "mismatch vs reference"

    print("KERNEL_OK")
</pallas_src>

<mosaic_0001>
module attributes {stable_mosaic.version = 11 : i64} {
  func.func @rnn_kernel(%arg0: memref<8x2x128xf32, #tpu.memory_space<vmem>>, %arg1: memref<256x128xf32, #tpu.memory_space<vmem>>, %arg2: memref<1x128xf32, #tpu.memory_space<vmem>>, %arg3: memref<256x128xf32, #tpu.memory_space<vmem>>, %arg4: memref<1x128xf32, #tpu.memory_space<vmem>>, %arg5: memref<128x128xf32, #tpu.memory_space<vmem>>, %arg6: memref<1x128xf32, #tpu.memory_space<vmem>>, %arg7: memref<2x128xf32, #tpu.memory_space<vmem>>) attributes {dimension_semantics = [], scalar_prefetch = 0 : i64, scratch_operands = 0 : i64, tpu.core_type = #tpu.core_type<tc>} {
    %c0 = arith.constant 0 : index
    %c0_0 = arith.constant 0 : index
    %0 = vector.load %arg1[%c0, %c0_0] : memref<256x128xf32, #tpu.memory_space<vmem>>, vector<256x128xf32>
    %c0_1 = arith.constant 0 : index
    %c0_2 = arith.constant 0 : index
    %1 = vector.load %arg2[%c0_1, %c0_2] : memref<1x128xf32, #tpu.memory_space<vmem>>, vector<1x128xf32>
    %c0_3 = arith.constant 0 : index
    %c0_4 = arith.constant 0 : index
    %2 = vector.load %arg3[%c0_3, %c0_4] : memref<256x128xf32, #tpu.memory_space<vmem>>, vector<256x128xf32>
    %c0_5 = arith.constant 0 : index
    %c0_6 = arith.constant 0 : index
    %3 = vector.load %arg4[%c0_5, %c0_6] : memref<1x128xf32, #tpu.memory_space<vmem>>, vector<1x128xf32>
    %cst = arith.constant 0.000000e+00 : f32
    %4 = vector.broadcast %cst : f32 to vector<2x128xf32>
    %cst_7 = arith.constant 0.000000e+00 : f32
    %5 = vector.broadcast %cst_7 : f32 to vector<2x128xf32>
    %c0_8 = arith.constant 0 : index
    %c0_9 = arith.constant 0 : index
    %c0_10 = arith.constant 0 : index
    %6 = vector.load %arg0[%c0_8, %c0_9, %c0_10] : memref<8x2x128xf32, #tpu.memory_space<vmem>>, vector<1x2x128xf32>
    %7 = vector.shape_cast %6 : vector<1x2x128xf32> to vector<2x128xf32>
    %8 = tpu.concatenate %7, %4 in 1 : vector<2x128xf32>, vector<2x128xf32> -> vector<2x256xf32>
    %cst_11 = arith.constant dense<0.000000e+00> : vector<2x128xf32>
    %9 = tpu.matmul %8, %0, %cst_11 {dimension_numbers = #tpu.dot_dimension_numbers<[1], [0], [0], [1], [0, 0, 1, 1], [], []>} : vector<2x256xf32>, vector<256x128xf32>, vector<2x128xf32> -> vector<2x128xf32>
    %10 = vector.broadcast %1 : vector<1x128xf32> to vector<2x128xf32>
    %11 = arith.addf %9, %10 : vector<2x128xf32>
    %12 = math.tanh %11 : vector<2x128xf32>
    %13 = tpu.concatenate %12, %5 in 1 : vector<2x128xf32>, vector<2x128xf32> -> vector<2x256xf32>
    %cst_12 = arith.constant dense<0.000000e+00> : vector<2x128xf32>
    %14 = tpu.matmul %13, %2, %cst_12 {dimension_numbers = #tpu.dot_dimension_numbers<[1], [0], [0], [1], [0, 0, 1, 1], [], []>} : vector<2x256xf32>, vector<256x128xf32>, vector<2x128xf32> -> vector<2x128xf32>
    %15 = vector.broadcast %3 : vector<1x128xf32> to vector<2x128xf32>
    %16 = arith.addf %14, %15 : vector<2x128xf32>
    %17 = math.tanh %16 : vector<2x128xf32>
    %c1 = arith.constant 1 : index
    %c0_13 = arith.constant 0 : index
    %c0_14 = arith.constant 0 : index
    %18 = vector.load %arg0[%c1, %c0_13, %c0_14] : memref<8x2x128xf32, #tpu.memory_space<vmem>>, vector<1x2x128xf32>
    %19 = vector.shape_cast %18 : vector<1x2x128xf32> to vector<2x128xf32>
    %20 = tpu.concatenate %19, %12 in 1 : vector<2x128xf32>, vector<2x128xf32> -> vector<2x256xf32>
    %cst_15 = arith.constant dense<0.000000e+00> : vector<2x128xf32>
    %21 = tpu.matmul %20, %0, %cst_15 {dimension_numbers = #tpu.dot_dimension_numbers<[1], [0], [0], [1], [0, 0, 1, 1], [], []>} : vector<2x256xf32>, vector<256x128xf32>, vector<2x128xf32> -> vector<2x128xf32>
    %22 = vector.broadcast %1 : vector<1x128xf32> to vector<2x128xf32>
    %23 = arith.addf %21, %22 : vector<2x128xf32>
    %24 = math.tanh %23 : vector<2x128xf32>
    %25 = tpu.concatenate %24, %17 in 1 : vector<2x128xf32>, vector<2x128xf32> -> vector<2x256xf32>
    %cst_16 = arith.constant dense<0.000000e+00> : vector<2x128xf32>
    %26 = tpu.matmul %25, %2, %cst_16 {dimension_numbers = #tpu.dot_dimension_numbers<[1], [0], [0], [1], [0, 0, 1, 1], [], []>} : vector<2x256xf32>, vector<256x128xf32>, vector<2x128xf32> -> vector<2x128xf32>
    %27 = vector.broadcast %3 : vector<1x128xf32> to vector<2x128xf32>
    %28 = arith.addf %26, %27 : vector<2x128xf32>
    %29 = math.tanh %28 : vector<2x128xf32>
    %c2 = arith.constant 2 : index
    %c0_17 = arith.constant 0 : index
    %c0_18 = arith.constant 0 : index
    %30 = vector.load %arg0[%c2, %c0_17, %c0_18] : memref<8x2x128xf32, #tpu.memory_space<vmem>>, vector<1x2x128xf32>
    %31 = vector.shape_cast %30 : vector<1x2x128xf32> to vector<2x128xf32>
    %32 = tpu.concatenate %31, %24 in 1 : vector<2x128xf32>, vector<2x128xf32> -> vector<2x256xf32>
    %cst_19 = arith.constant dense<0.000000e+00> : vector<2x128xf32>
    %33 = tpu.matmul %32, %0, %cst_19 {dimension_numbers = #tpu.dot_dimension_numbers<[1], [0], [0], [1], [0, 0, 1, 1], [], []>} : vector<2x256xf32>, vector<256x128xf32>, vector<2x128xf32> -> vector<2x128xf32>
    %34 = vector.broadcast %1 : vector<1x128xf32> to vector<2x128xf32>
    %35 = arith.addf %33, %34 : vector<2x128xf32>
    %36 = math.tanh %35 : vector<2x128xf32>
    %37 = tpu.concatenate %36, %29 in 1 : vector<2x128xf32>, vector<2x128xf32> -> vector<2x256xf32>
    %cst_20 = arith.constant dense<0.000000e+00> : vector<2x128xf32>
    %38 = tpu.matmul %37, %2, %cst_20 {dimension_numbers = #tpu.dot_dimension_numbers<[1], [0], [0], [1], [0, 0, 1, 1], [], []>} : vector<2x256xf32>, vector<256x128xf32>, vector<2x128xf32> -> vector<2x128xf32>
    %39 = vector.broadcast %3 : vector<1x128xf32> to vector<2x128xf32>
    %40 = arith.addf %38, %39 : vector<2x128xf32>
    %41 = math.tanh %40 : vector<2x128xf32>
    %c3 = arith.constant 3 : index
    %c0_21 = arith.constant 0 : index
    %c0_22 = arith.constant 0 : index
    %42 = vector.load %arg0[%c3, %c0_21, %c0_22] : memref<8x2x128xf32, #tpu.memory_space<vmem>>, vector<1x2x128xf32>
    %43 = vector.shape_cast %42 : vector<1x2x128xf32> to vector<2x128xf32>
    %44 = tpu.concatenate %43, %36 in 1 : vector<2x128xf32>, vector<2x128xf32> -> vector<2x256xf32>
    %cst_23 = arith.constant dense<0.000000e+00> : vector<2x128xf32>
    %45 = tpu.matmul %44, %0, %cst_23 {dimension_numbers = #tpu.dot_dimension_numbers<[1], [0], [0], [1], [0, 0, 1, 1], [], []>} : vector<2x256xf32>, vector<256x128xf32>, vector<2x128xf32> -> vector<2x128xf32>
    %46 = vector.broadcast %1 : vector<1x128xf32> to vector<2x128xf32>
    %47 = arith.addf %45, %46 : vector<2x128xf32>
    %48 = math.tanh %47 : vector<2x128xf32>
    %49 = tpu.concatenate %48, %41 in 1 : vector<2x128xf32>, vector<2x128xf32> -> vector<2x256xf32>
    %cst_24 = arith.constant dense<0.000000e+00> : vector<2x128xf32>
    %50 = tpu.matmul %49, %2, %cst_24 {dimension_numbers = #tpu.dot_dimension_numbers<[1], [0], [0], [1], [0, 0, 1, 1], [], []>} : vector<2x256xf32>, vector<256x128xf32>, vector<2x128xf32> -> vector<2x128xf32>
    %51 = vector.broadcast %3 : vector<1x128xf32> to vector<2x128xf32>
    %52 = arith.addf %50, %51 : vector<2x128xf32>
    %53 = math.tanh %52 : vector<2x128xf32>
    %c4 = arith.constant 4 : index
    %c0_25 = arith.constant 0 : index
    %c0_26 = arith.constant 0 : index
    %54 = vector.load %arg0[%c4, %c0_25, %c0_26] : memref<8x2x128xf32, #tpu.memory_space<vmem>>, vector<1x2x128xf32>
    %55 = vector.shape_cast %54 : vector<1x2x128xf32> to vector<2x128xf32>
    %56 = tpu.concatenate %55, %48 in 1 : vector<2x128xf32>, vector<2x128xf32> -> vector<2x256xf32>
    %cst_27 = arith.constant dense<0.000000e+00> : vector<2x128xf32>
    %57 = tpu.matmul %56, %0, %cst_27 {dimension_numbers = #tpu.dot_dimension_numbers<[1], [0], [0], [1], [0, 0, 1, 1], [], []>} : vector<2x256xf32>, vector<256x128xf32>, vector<2x128xf32> -> vector<2x128xf32>
    %58 = vector.broadcast %1 : vector<1x128xf32> to vector<2x128xf32>
    %59 = arith.addf %57, %58 : vector<2x128xf32>
    %60 = math.tanh %59 : vector<2x128xf32>
    %61 = tpu.concatenate %60, %53 in 1 : vector<2x128xf32>, vector<2x128xf32> -> vector<2x256xf32>
    %cst_28 = arith.constant dense<0.000000e+00> : vector<2x128xf32>
    %62 = tpu.matmul %61, %2, %cst_28 {dimension_numbers = #tpu.dot_dimension_numbers<[1], [0], [0], [1], [0, 0, 1, 1], [], []>} : vector<2x256xf32>, vector<256x128xf32>, vector<2x128xf32> -> vector<2x128xf32>
    %63 = vector.broadcast %3 : vector<1x128xf32> to vector<2x128xf32>
    %64 = arith.addf %62, %63 : vector<2x128xf32>
    %65 = math.tanh %64 : vector<2x128xf32>
    %c5 = arith.constant 5 : index
    %c0_29 = arith.constant 0 : index
    %c0_30 = arith.constant 0 : index
    %66 = vector.load %arg0[%c5, %c0_29, %c0_30] : memref<8x2x128xf32, #tpu.memory_space<vmem>>, vector<1x2x128xf32>
    %67 = vector.shape_cast %66 : vector<1x2x128xf32> to vector<2x128xf32>
    %68 = tpu.concatenate %67, %60 in 1 : vector<2x128xf32>, vector<2x128xf32> -> vector<2x256xf32>
    %cst_31 = arith.constant dense<0.000000e+00> : vector<2x128xf32>
    %69 = tpu.matmul %68, %0, %cst_31 {dimension_numbers = #tpu.dot_dimension_numbers<[1], [0], [0], [1], [0, 0, 1, 1], [], []>} : vector<2x256xf32>, vector<256x128xf32>, vector<2x128xf32> -> vector<2x128xf32>
    %70 = vector.broadcast %1 : vector<1x128xf32> to vector<2x128xf32>
    %71 = arith.addf %69, %70 : vector<2x128xf32>
    %72 = math.tanh %71 : vector<2x128xf32>
    %73 = tpu.concatenate %72, %65 in 1 : vector<2x128xf32>, vector<2x128xf32> -> vector<2x256xf32>
    %cst_32 = arith.constant dense<0.000000e+00> : vector<2x128xf32>
    %74 = tpu.matmul %73, %2, %cst_32 {dimension_numbers = #tpu.dot_dimension_numbers<[1], [0], [0], [1], [0, 0, 1, 1], [], []>} : vector<2x256xf32>, vector<256x128xf32>, vector<2x128xf32> -> vector<2x128xf32>
    %75 = vector.broadcast %3 : vector<1x128xf32> to vector<2x128xf32>
    %76 = arith.addf %74, %75 : vector<2x128xf32>
    %77 = math.tanh %76 : vector<2x128xf32>
    %c6 = arith.constant 6 : index
    %c0_33 = arith.constant 0 : index
    %c0_34 = arith.constant 0 : index
    %78 = vector.load %arg0[%c6, %c0_33, %c0_34] : memref<8x2x128xf32, #tpu.memory_space<vmem>>, vector<1x2x128xf32>
    %79 = vector.shape_cast %78 : vector<1x2x128xf32> to vector<2x128xf32>
    %80 = tpu.concatenate %79, %72 in 1 : vector<2x128xf32>, vector<2x128xf32> -> vector<2x256xf32>
    %cst_35 = arith.constant dense<0.000000e+00> : vector<2x128xf32>
    %81 = tpu.matmul %80, %0, %cst_35 {dimension_numbers = #tpu.dot_dimension_numbers<[1], [0], [0], [1], [0, 0, 1, 1], [], []>} : vector<2x256xf32>, vector<256x128xf32>, vector<2x128xf32> -> vector<2x128xf32>
    %82 = vector.broadcast %1 : vector<1x128xf32> to vector<2x128xf32>
    %83 = arith.addf %81, %82 : vector<2x128xf32>
    %84 = math.tanh %83 : vector<2x128xf32>
    %85 = tpu.concatenate %84, %77 in 1 : vector<2x128xf32>, vector<2x128xf32> -> vector<2x256xf32>
    %cst_36 = arith.constant dense<0.000000e+00> : vector<2x128xf32>
    %86 = tpu.matmul %85, %2, %cst_36 {dimension_numbers = #tpu.dot_dimension_numbers<[1], [0], [0], [1], [0, 0, 1, 1], [], []>} : vector<2x256xf32>, vector<256x128xf32>, vector<2x128xf32> -> vector<2x128xf32>
    %87 = vector.broadcast %3 : vector<1x128xf32> to vector<2x128xf32>
    %88 = arith.addf %86, %87 : vector<2x128xf32>
    %89 = math.tanh %88 : vector<2x128xf32>
    %c7 = arith.constant 7 : index
    %c0_37 = arith.constant 0 : index
    %c0_38 = arith.constant 0 : index
    %90 = vector.load %arg0[%c7, %c0_37, %c0_38] : memref<8x2x128xf32, #tpu.memory_space<vmem>>, vector<1x2x128xf32>
    %91 = vector.shape_cast %90 : vector<1x2x128xf32> to vector<2x128xf32>
    %92 = tpu.concatenate %91, %84 in 1 : vector<2x128xf32>, vector<2x128xf32> -> vector<2x256xf32>
    %cst_39 = arith.constant dense<0.000000e+00> : vector<2x128xf32>
    %93 = tpu.matmul %92, %0, %cst_39 {dimension_numbers = #tpu.dot_dimension_numbers<[1], [0], [0], [1], [0, 0, 1, 1], [], []>} : vector<2x256xf32>, vector<256x128xf32>, vector<2x128xf32> -> vector<2x128xf32>
    %94 = vector.broadcast %1 : vector<1x128xf32> to vector<2x128xf32>
    %95 = arith.addf %93, %94 : vector<2x128xf32>
    %96 = math.tanh %95 : vector<2x128xf32>
    %97 = tpu.concatenate %96, %89 in 1 : vector<2x128xf32>, vector<2x128xf32> -> vector<2x256xf32>
    %cst_40 = arith.constant dense<0.000000e+00> : vector<2x128xf32>
    %98 = tpu.matmul %97, %2, %cst_40 {dimension_numbers = #tpu.dot_dimension_numbers<[1], [0], [0], [1], [0, 0, 1, 1], [], []>} : vector<2x256xf32>, vector<256x128xf32>, vector<2x128xf32> -> vector<2x128xf32>
    %99 = vector.broadcast %3 : vector<1x128xf32> to vector<2x128xf32>
    %100 = arith.addf %98, %99 : vector<2x128xf32>
    %101 = math.tanh %100 : vector<2x128xf32>
    %c0_41 = arith.constant 0 : index
    %c0_42 = arith.constant 0 : index
    %102 = vector.load %arg5[%c0_41, %c0_42] : memref<128x128xf32, #tpu.memory_space<vmem>>, vector<128x128xf32>
    %cst_43 = arith.constant dense<0.000000e+00> : vector<2x128xf32>
    %103 = tpu.matmul %101, %102, %cst_43 {dimension_numbers = #tpu.dot_dimension_numbers<[1], [0], [0], [1], [0, 0, 1, 1], [], []>} : vector<2x128xf32>, vector<128x128xf32>, vector<2x128xf32> -> vector<2x128xf32>
    %c0_44 = arith.constant 0 : index
    %c0_45 = arith.constant 0 : index
    %104 = vector.load %arg6[%c0_44, %c0_45] : memref<1x128xf32, #tpu.memory_space<vmem>>, vector<1x128xf32>
    %105 = vector.broadcast %104 : vector<1x128xf32> to vector<2x128xf32>
    %106 = arith.addf %103, %105 : vector<2x128xf32>
    %c0_46 = arith.constant 0 : index
    %c0_47 = arith.constant 0 : index
    %107 = vector.load %arg7[%c0_46, %c0_47] : memref<2x128xf32, #tpu.memory_space<vmem>>, vector<2x128xf32>
    tpu.vector_store %arg7[%c0_46, %c0_47], %106 {strides = array<i32>} : memref<2x128xf32, #tpu.memory_space<vmem>>, vector<2x128xf32>,
    return
  }
}

</mosaic_0001>

<llo_original>
// kernel: tpu_custom_call.1
$region0: #{tpu_custom_call.1}
  #allocation0 [shape = 'u32[]', space=smem, size = 0x4, offset = 0x4, fixed_abs, tag = 'smem constant byte address 0x4 - core index']
  #allocation1 [shape = 'u32[72,128]{1,0:T(1,128)}', space=vmem, size = 0x9000, scoped, tag = 'internal scratch']
  %s0 = inlined_call_operand.hbm [shape: f32[8,2,128], index: 0, kind: input, shape index: {}]
  %s1 = inlined_call_operand.hbm [shape: f32[256,128], index: 1, kind: input, shape index: {}]
  %s2 = inlined_call_operand.vmem [shape: f32[1,128], index: 2, kind: input, shape index: {}]
  %s3 = inlined_call_operand.hbm [shape: f32[256,128], index: 3, kind: input, shape index: {}]
  %s4 = inlined_call_operand.vmem [shape: f32[1,128], index: 4, kind: input, shape index: {}]
  %s5 = inlined_call_operand.hbm [shape: f32[128,128], index: 5, kind: input, shape index: {}]
  %s6 = inlined_call_operand.vmem [shape: f32[1,128], index: 6, kind: input, shape index: {}]
  %s7 = inlined_call_operand.hbm [shape: f32[2,128], index: 7, kind: output, shape index: {}]
  %s8 = sld [smem:[#allocation0]]
  $region54: #{tpu_custom_call.1} parent=0
    _
  %s10 = ssub.s32 1, %s8
  %s11 = scalar_select 0, %s10, %s8
  $region1: #{tpu_custom_call.1} parent=0
    #allocation2 [shape = 'u8[8192]{0}', space=vmem, size = 0x2000, scoped, tag = 'input window, operand 0, single buffered']
    #allocation3 [shape = 's32[1]{0}', space=sflag, size = 0x4, scoped, tag = 'scoped memory for tpu_custom_call.1']
    #allocation4 [shape = 's32[1]{0}', space=sflag, size = 0x4, scoped, tag = 'scoped memory for tpu_custom_call.1']
    #allocation5 [shape = 'u8[131072]{0}', space=vmem, size = 0x20000, scoped, tag = 'input window, operand 1, single buffered']
    #allocation6 [shape = 's32[1]{0}', space=sflag, size = 0x4, scoped, tag = 'scoped memory for tpu_custom_call.1']
    #allocation7 [shape = 'u8[131072]{0}', space=vmem, size = 0x20000, scoped, tag = 'input window, operand 3, single buffered']
    #allocation8 [shape = 'u8[65536]{0}', space=vmem, size = 0x10000, scoped, tag = 'input window, operand 5, single buffered']
    #allocation9 [shape = 's32[1]{0}', space=sflag, size = 0x4, scoped, tag = 'scoped memory for tpu_custom_call.1']
    #allocation10 [shape = 'u8[1024]{0}', space=vmem, size = 0x400, scoped, tag = 'output window, operand 0, single buffered']
    %12 = vsyncpa [#allocation3], 0
    %13 = vsyncpa [#allocation6], 0
    %14 = vsyncpa [#allocation9], 0
    %15 = vsyncpa [#allocation4], 0
    // Predicated region
    $region2: #{tpu_custom_call.1} parent=1 // pred_check
      _
    $region3: #{tpu_custom_call.1} parent=1 // pred_check_branch
      %17 = sbr.rel (0) target = $region5
    $region4: #{tpu_custom_call.1} parent=1 // pred_region
      %19 = vsyncadd [#allocation3], 0
      %s20 = sshll.u32 %s0, 4
      %s21 = int_to_ptr.hbm [resolvable:$true] %s20
      %s22 = sshll.u32 [#allocation2], 4
      %s23 = int_to_ptr.vmem [resolvable:$true] %s22
      %28 = dma.hbm_to_vmem [thread:$0]  %s21, 256, %s23, [#allocation3], 32, 32, 2
    $region5: #{tpu_custom_call.1} parent=1 // pred_fallthru
      _
    // Predicated region
    $region6: #{tpu_custom_call.1} parent=1 // pred_check
      _
    $region7: #{tpu_custom_call.1} parent=1 // pred_check_branch
      %30 = sbr.rel (0) target = $region9
    $region8: #{tpu_custom_call.1} parent=1 // pred_region
      %32 = vsyncadd [#allocation6], 0
      %s33 = sshll.u32 %s1, 4
      %s34 = int_to_ptr.hbm [resolvable:$true] %s33
      %s35 = sshll.u32 [#allocation5], 4
      %s36 = int_to_ptr.vmem [resolvable:$true] %s35
      %41 = dma.hbm_to_vmem [thread:$0]  %s34, 4096, %s36, [#allocation6], 128, 128, 8
    $region9: #{tpu_custom_call.1} parent=1 // pred_fallthru
      _
    // Predicated region
    $region10: #{tpu_custom_call.1} parent=1 // pred_check
      _
    $region11: #{tpu_custom_call.1} parent=1 // pred_check_branch
      %43 = sbr.rel (0) target = $region13
    $region12: #{tpu_custom_call.1} parent=1 // pred_region
      _
    $region13: #{tpu_custom_call.1} parent=1 // pred_fallthru
      _
    // Predicated region
    $region14: #{tpu_custom_call.1} parent=1 // pred_check
      _
    $region15: #{tpu_custom_call.1} parent=1 // pred_check_branch
      %45 = sbr.rel (0) target = $region17
    $region16: #{tpu_custom_call.1} parent=1 // pred_region
      %47 = vsyncadd [#allocation6], 0
      %s48 = sshll.u32 %s3, 4
      %s49 = int_to_ptr.hbm [resolvable:$true] %s48
      %s50 = sshll.u32 [#allocation7], 4
      %s51 = int_to_ptr.vmem [resolvable:$true] %s50
      %56 = dma.hbm_to_vmem [thread:$0]  %s49, 4096, %s51, [#allocation6], 128, 128, 8
    $region17: #{tpu_custom_call.1} parent=1 // pred_fallthru
      _
    // Predicated region
    $region18: #{tpu_custom_call.1} parent=1 // pred_check
      _
    $region19: #{tpu_custom_call.1} parent=1 // pred_check_branch
      %58 = sbr.rel (0) target = $region21
    $region20: #{tpu_custom_call.1} parent=1 // pred_region
      _
    $region21: #{tpu_custom_call.1} parent=1 // pred_fallthru
      _
    // Predicated region
    $region22: #{tpu_custom_call.1} parent=1 // pred_check
      _
    $region23: #{tpu_custom_call.1} parent=1 // pred_check_branch
      %60 = sbr.rel (0) target = $region25
    $region24: #{tpu_custom_call.1} parent=1 // pred_region
      %62 = vsyncadd [#allocation9], 0
      %s63 = sshll.u32 %s5, 4
      %s64 = int_to_ptr.hbm [resolvable:$true] %s63
      %s65 = sshll.u32 [#allocation8], 4
      %s66 = int_to_ptr.vmem [resolvable:$true] %s65
      %71 = dma.hbm_to_vmem [thread:$0]  %s64, 2048, %s66, [#allocation9], 128, 128, 8
    $region25: #{tpu_custom_call.1} parent=1 // pred_fallthru
      _
    // Predicated region
    $region26: #{tpu_custom_call.1} parent=1 // pred_check
      _
    $region27: #{tpu_custom_call.1} parent=1 // pred_check_branch
      %73 = sbr.rel (0) target = $region29
    $region28: #{tpu_custom_call.1} parent=1 // pred_region
      _
    $region29: #{tpu_custom_call.1} parent=1 // pred_fallthru
      _
    // Predicated region
    $region30: #{tpu_custom_call.1} parent=1 // pred_check
      _
    $region31: #{tpu_custom_call.1} parent=1 // pred_check_branch
      %75 = sbr.rel (0) target = $region33
    $region32: #{tpu_custom_call.1} parent=1 // pred_region
      %77 = dma.done [#allocation3], 256
    $region33: #{tpu_custom_call.1} parent=1 // pred_fallthru
      _
    // Predicated region
    $region34: #{tpu_custom_call.1} parent=1 // pred_check
      _
    $region35: #{tpu_custom_call.1} parent=1 // pred_check_branch
      %79 = sbr.rel (0) target = $region37
    $region36: #{tpu_custom_call.1} parent=1 // pred_region
      %81 = dma.done [#allocation6], 4096
    $region37: #{tpu_custom_call.1} parent=1 // pred_fallthru
      _
    // Predicated region
    $region38: #{tpu_custom_call.1} parent=1 // pred_check
      _
    $region39: #{tpu_custom_call.1} parent=1 // pred_check_branch
      %83 = sbr.rel (0) target = $region41
    $region40: #{tpu_custom_call.1} parent=1 // pred_region
      %85 = dma.done [#allocation6], 4096
    $region41: #{tpu_custom_call.1} parent=1 // pred_fallthru
      _
    // Predicated region
    $region42: #{tpu_custom_call.1} parent=1 // pred_check
      _
    $region43: #{tpu_custom_call.1} parent=1 // pred_check_branch
      %87 = sbr.rel (0) target = $region45
    $region44: #{tpu_custom_call.1} parent=1 // pred_region
      %89 = dma.done [#allocation9], 2048
    $region45: #{tpu_custom_call.1} parent=1 // pred_fallthru
      _
    %v90 = vld [vmem:[#allocation5] sm:$0xff]
    %v91 = vld [vmem:[#allocation5 + $0x8] sm:$0xff]
    %v92 = vld [vmem:[#allocation5 + $0x10] sm:$0xff]
    %v93 = vld [vmem:[#allocation5 + $0x18] sm:$0xff]
    %v94 = vld [vmem:[#allocation5 + $0x20] sm:$0xff]
    %v95 = vld [vmem:[#allocation5 + $0x28] sm:$0xff]
    %v96 = vld [vmem:[#allocation5 + $0x30] sm:$0xff]
    %v97 = vld [vmem:[#allocation5 + $0x38] sm:$0xff]
    %v98 = vld [vmem:[#allocation5 + $0x40] sm:$0xff]
    %v99 = vld [vmem:[#allocation5 + $0x48] sm:$0xff]
    %v100 = vld [vmem:[#allocation5 + $0x50] sm:$0xff]
    %v101 = vld [vmem:[#allocation5 + $0x58] sm:$0xff]
    %v102 = vld [vmem:[#allocation5 + $0x60] sm:$0xff]
    %v103 = vld [vmem:[#allocation5 + $0x68] sm:$0xff]
    %v104 = vld [vmem:[#allocation5 + $0x70] sm:$0xff]
    %v105 = vld [vmem:[#allocation5 + $0x78] sm:$0xff]
    %v106 = vld [vmem:[#allocation5 + $0x80] sm:$0xff]
    %v107 = vld [vmem:[#allocation5 + $0x88] sm:$0xff]
    %v108 = vld [vmem:[#allocation5 + $0x90] sm:$0xff]
    %v109 = vld [vmem:[#allocation5 + $0x98] sm:$0xff]
    %v110 = vld [vmem:[#allocation5 + $0xa0] sm:$0xff]
    %v111 = vld [vmem:[#allocation5 + $0xa8] sm:$0xff]
    %v112 = vld [vmem:[#allocation5 + $0xb0] sm:$0xff]
    %v113 = vld [vmem:[#allocation5 + $0xb8] sm:$0xff]
    %v114 = vld [vmem:[#allocation5 + $0xc0] sm:$0xff]
    %v115 = vld [vmem:[#allocation5 + $0xc8] sm:$0xff]
    %v116 = vld [vmem:[#allocation5 + $0xd0] sm:$0xff]
    %v117 = vld [vmem:[#allocation5 + $0xd8] sm:$0xff]
    %v118 = vld [vmem:[#allocation5 + $0xe0] sm:$0xff]
    %v119 = vld [vmem:[#allocation5 + $0xe8] sm:$0xff]
    %v120 = vld [vmem:[#allocation5 + $0xf0] sm:$0xff]
    %v121 = vld [vmem:[#allocation5 + $0xf8] sm:$0xff]
    %v122 = vld [vmem:[%s2] sm:$0x1]
    %v123 = vld [vmem:[#allocation7] sm:$0xff]
    %v124 = vld [vmem:[#allocation7 + $0x8] sm:$0xff]
    %v125 = vld [vmem:[#allocation7 + $0x10] sm:$0xff]
    %v126 = vld [vmem:[#allocation7 + $0x18] sm:$0xff]
    %v127 = vld [vmem:[#allocation7 + $0x20] sm:$0xff]
    %v128 = vld [vmem:[#allocation7 + $0x28] sm:$0xff]
    %v129 = vld [vmem:[#allocation7 + $0x30] sm:$0xff]
    %v130 = vld [vmem:[#allocation7 + $0x38] sm:$0xff]
    %v131 = vld [vmem:[#allocation7 + $0x40] sm:$0xff]
    %v132 = vld [vmem:[#allocation7 + $0x48] sm:$0xff]
    %v133 = vld [vmem:[#allocation7 + $0x50] sm:$0xff]
    %v134 = vld [vmem:[#allocation7 + $0x58] sm:$0xff]
    %v135 = vld [vmem:[#allocation7 + $0x60] sm:$0xff]
    %v136 = vld [vmem:[#allocation7 + $0x68] sm:$0xff]
    %v137 = vld [vmem:[#allocation7 + $0x70] sm:$0xff]
    %v138 = vld [vmem:[#allocation7 + $0x78] sm:$0xff]
    %v139 = vld [vmem:[#allocation7 + $0x80] sm:$0xff]
    %v140 = vld [vmem:[#allocation7 + $0x88] sm:$0xff]
    %v141 = vld [vmem:[#allocation7 + $0x90] sm:$0xff]
    %v142 = vld [vmem:[#allocation7 + $0x98] sm:$0xff]
    %v143 = vld [vmem:[#allocation7 + $0xa0] sm:$0xff]
    %v144 = vld [vmem:[#allocation7 + $0xa8] sm:$0xff]
    %v145 = vld [vmem:[#allocation7 + $0xb0] sm:$0xff]
    %v146 = vld [vmem:[#allocation7 + $0xb8] sm:$0xff]
    %v147 = vld [vmem:[#allocation7 + $0xc0] sm:$0xff]
    %v148 = vld [vmem:[#allocation7 + $0xc8] sm:$0xff]
    %v149 = vld [vmem:[#allocation7 + $0xd0] sm:$0xff]
    %v150 = vld [vmem:[#allocation7 + $0xd8] sm:$0xff]
    %v151 = vld [vmem:[#allocation7 + $0xe0] sm:$0xff]
    %v152 = vld [vmem:[#allocation7 + $0xe8] sm:$0xff]
    %v153 = vld [vmem:[#allocation7 + $0xf0] sm:$0xff]
    %v154 = vld [vmem:[#allocation7 + $0xf8] sm:$0xff]
    %v155 = vld [vmem:[%s4] sm:$0x1]
    %v156 = vld [vmem:[#allocation2] sm:$0x3]
    %v158 = vperm.slane %v122, 0
    %160 = vmatpush.msra.mxu0 %v105
    %161 = vmatpush.msra.mxu0 %v104
    %162 = vmatpush.msra.mxu0 %v103
    %163 = vmatpush.msra.mxu0 %v102
    %164 = vmatpush.msra.mxu0 %v101
    %165 = vmatpush.msra.mxu0 %v100
    %166 = vmatpush.msra.mxu0 %v99
    %167 = vmatpush.msra.mxu0 %v98
    %168 = vmatpush.msra.mxu0 %v97
    %169 = vmatpush.msra.mxu0 %v96
    %170 = vmatpush.msra.mxu0 %v95
    %171 = vmatpush.msra.mxu0 %v94
    %172 = vmatpush.msra.mxu0 %v93
    %173 = vmatpush.msra.mxu0 %v92
    %174 = vmatpush.msra.mxu0 %v91
    %175 = vmatpush.msra.mxu0 %v90
    %176 = vmatmul.f32.gmra.mxu0 %v156
    %v177 = vpop.f32.mrf.mxu0
    %v178 = vadd.f32 %v158, %v177
    %179 = vdwg.mxu0
    %180 = vmatpush.msra.mxu0 %v121
    %181 = vmatpush.msra.mxu0 %v120
    %182 = vmatpush.msra.mxu0 %v119
    %183 = vmatpush.msra.mxu0 %v118
    %184 = vmatpush.msra.mxu0 %v117
    %185 = vmatpush.msra.mxu0 %v116
    %186 = vmatpush.msra.mxu0 %v115
    %187 = vmatpush.msra.mxu0 %v114
    %188 = vmatpush.msra.mxu0 %v113
    %189 = vmatpush.msra.mxu0 %v112
    %190 = vmatpush.msra.mxu0 %v111
    %191 = vmatpush.msra.mxu0 %v110
    %192 = vmatpush.msra.mxu0 %v109
    %193 = vmatpush.msra.mxu0 %v108
    %194 = vmatpush.msra.mxu0 %v107
    %195 = vmatpush.msra.mxu0 %v106
    %196 = vmatmul.f32.gmra.mxu0 0.0
    %v197 = vpop.f32.mrf.mxu0
    %v198 = vadd.f32 %v178, %v197
    %199 = vdwg.mxu0
    %v200 = vtanh.pop %v198
    %v202 = vperm.slane %v155, 0
    %204 = vmatpush.msra.mxu0 %v138
    %205 = vmatpush.msra.mxu0 %v137
    %206 = vmatpush.msra.mxu0 %v136
    %207 = vmatpush.msra.mxu0 %v135
    %208 = vmatpush.msra.mxu0 %v134
    %209 = vmatpush.msra.mxu0 %v133
    %210 = vmatpush.msra.mxu0 %v132
    %211 = vmatpush.msra.mxu0 %v131
    %212 = vmatpush.msra.mxu0 %v130
    %213 = vmatpush.msra.mxu0 %v129
    %214 = vmatpush.msra.mxu0 %v128
    %215 = vmatpush.msra.mxu0 %v127
    %216 = vmatpush.msra.mxu0 %v126
    %217 = vmatpush.msra.mxu0 %v125
    %218 = vmatpush.msra.mxu0 %v124
    %219 = vmatpush.msra.mxu0 %v123
    %220 = vmatmul.f32.gmra.mxu0 %v200
    %v221 = vpop.f32.mrf.mxu0
    %v222 = vadd.f32 %v202, %v221
    %223 = vdwg.mxu0
    %224 = vmatpush.msra.mxu0 %v154
    %225 = vmatpush.msra.mxu0 %v153
    %226 = vmatpush.msra.mxu0 %v152
    %227 = vmatpush.msra.mxu0 %v151
    %228 = vmatpush.msra.mxu0 %v150
    %229 = vmatpush.msra.mxu0 %v149
    %230 = vmatpush.msra.mxu0 %v148
    %231 = vmatpush.msra.mxu0 %v147
    %232 = vmatpush.msra.mxu0 %v146
    %233 = vmatpush.msra.mxu0 %v145
    %234 = vmatpush.msra.mxu0 %v144
    %235 = vmatpush.msra.mxu0 %v143
    %236 = vmatpush.msra.mxu0 %v142
    %237 = vmatpush.msra.mxu0 %v141
    %238 = vmatpush.msra.mxu0 %v140
    %239 = vmatpush.msra.mxu0 %v139
    %240 = vmatmul.f32.gmra.mxu0 0.0
    %v241 = vpop.f32.mrf.mxu0
    %v242 = vadd.f32 %v222, %v241
    %243 = vdwg.mxu0
    %v244 = vtanh.pop %v242
    %s245 = scalar_lea.vmem [#allocation2], 2
    %v246 = vld [vmem:[%s245] sm:$0x3]
    %247 = vmatpush.msra.mxu0 %v105
    %248 = vmatpush.msra.mxu0 %v104
    %249 = vmatpush.msra.mxu0 %v103
    %250 = vmatpush.msra.mxu0 %v102
    %251 = vmatpush.msra.mxu0 %v101
    %252 = vmatpush.msra.mxu0 %v100
    %253 = vmatpush.msra.mxu0 %v99
    %254 = vmatpush.msra.mxu0 %v98
    %255 = vmatpush.msra.mxu0 %v97
    %256 = vmatpush.msra.mxu0 %v96
    %257 = vmatpush.msra.mxu0 %v95
    %258 = vmatpush.msra.mxu0 %v94
    %259 = vmatpush.msra.mxu0 %v93
    %260 = vmatpush.msra.mxu0 %v92
    %261 = vmatpush.msra.mxu0 %v91
    %262 = vmatpush.msra.mxu0 %v90
    %263 = vmatmul.f32.gmra.mxu0 %v246
    %v264 = vpop.f32.mrf.mxu0
    %v265 = vadd.f32 %v158, %v264
    %266 = vdwg.mxu0
    %267 = vmatpush.msra.mxu0 %v121
    %268 = vmatpush.msra.mxu0 %v120
    %269 = vmatpush.msra.mxu0 %v119
    %270 = vmatpush.msra.mxu0 %v118
    %271 = vmatpush.msra.mxu0 %v117
    %272 = vmatpush.msra.mxu0 %v116
    %273 = vmatpush.msra.mxu0 %v115
    %274 = vmatpush.msra.mxu0 %v114
    %275 = vmatpush.msra.mxu0 %v113
    %276 = vmatpush.msra.mxu0 %v112
    %277 = vmatpush.msra.mxu0 %v111
    %278 = vmatpush.msra.mxu0 %v110
    %279 = vmatpush.msra.mxu0 %v109
    %280 = vmatpush.msra.mxu0 %v108
    %281 = vmatpush.msra.mxu0 %v107
    %282 = vmatpush.msra.mxu0 %v106
    %283 = vmatmul.f32.gmra.mxu0 %v200
    %v284 = vpop.f32.mrf.mxu0
    %v285 = vadd.f32 %v265, %v284
    %286 = vdwg.mxu0
    %v287 = vtanh.pop %v285
    %288 = vmatpush.msra.mxu0 %v138
    %289 = vmatpush.msra.mxu0 %v137
    %290 = vmatpush.msra.mxu0 %v136
    %291 = vmatpush.msra.mxu0 %v135
    %292 = vmatpush.msra.mxu0 %v134
    %293 = vmatpush.msra.mxu0 %v133
    %294 = vmatpush.msra.mxu0 %v132
    %295 = vmatpush.msra.mxu0 %v131
    %296 = vmatpush.msra.mxu0 %v130
    %297 = vmatpush.msra.mxu0 %v129
    %298 = vmatpush.msra.mxu0 %v128
    %299 = vmatpush.msra.mxu0 %v127
    %300 = vmatpush.msra.mxu0 %v126
    %301 = vmatpush.msra.mxu0 %v125
    %302 = vmatpush.msra.mxu0 %v124
    %303 = vmatpush.msra.mxu0 %v123
    %304 = vmatmul.f32.gmra.mxu0 %v287
    %v305 = vpop.f32.mrf.mxu0
    %v306 = vadd.f32 %v202, %v305
    %307 = vdwg.mxu0
    %308 = vmatpush.msra.mxu0 %v154
    %309 = vmatpush.msra.mxu0 %v153
    %310 = vmatpush.msra.mxu0 %v152
    %311 = vmatpush.msra.mxu0 %v151
    %312 = vmatpush.msra.mxu0 %v150
    %313 = vmatpush.msra.mxu0 %v149
    %314 = vmatpush.msra.mxu0 %v148
    %315 = vmatpush.msra.mxu0 %v147
    %316 = vmatpush.msra.mxu0 %v146
    %317 = vmatpush.msra.mxu0 %v145
    %318 = vmatpush.msra.mxu0 %v144
    %319 = vmatpush.msra.mxu0 %v143
    %320 = vmatpush.msra.mxu0 %v142
    %321 = vmatpush.msra.mxu0 %v141
    %322 = vmatpush.msra.mxu0 %v140
    %323 = vmatpush.msra.mxu0 %v139
    %324 = vmatmul.f32.gmra.mxu0 %v244
    %v325 = vpop.f32.mrf.mxu0
    %v326 = vadd.f32 %v306, %v325
    %327 = vdwg.mxu0
    %v328 = vtanh.pop %v326
    %s329 = scalar_lea.vmem [#allocation2], 4
    %v330 = vld [vmem:[%s329] sm:$0x3]
    %331 = vmatpush.msra.mxu0 %v105
    %332 = vmatpush.msra.mxu0 %v104
    %333 = vmatpush.msra.mxu0 %v103
    %334 = vmatpush.msra.mxu0 %v102
    %335 = vmatpush.msra.mxu0 %v101
    %336 = vmatpush.msra.mxu0 %v100
    %337 = vmatpush.msra.mxu0 %v99
    %338 = vmatpush.msra.mxu0 %v98
    %339 = vmatpush.msra.mxu0 %v97
    %340 = vmatpush.msra.mxu0 %v96
    %341 = vmatpush.msra.mxu0 %v95
    %342 = vmatpush.msra.mxu0 %v94
    %343 = vmatpush.msra.mxu0 %v93
    %344 = vmatpush.msra.mxu0 %v92
    %345 = vmatpush.msra.mxu0 %v91
    %346 = vmatpush.msra.mxu0 %v90
    %347 = vmatmul.f32.gmra.mxu0 %v330
    %v348 = vpop.f32.mrf.mxu0
    %v349 = vadd.f32 %v158, %v348
    %350 = vdwg.mxu0
    %351 = vmatpush.msra.mxu0 %v121
    %352 = vmatpush.msra.mxu0 %v120
    %353 = vmatpush.msra.mxu0 %v119
    %354 = vmatpush.msra.mxu0 %v118
    %355 = vmatpush.msra.mxu0 %v117
    %356 = vmatpush.msra.mxu0 %v116
    %357 = vmatpush.msra.mxu0 %v115
    %358 = vmatpush.msra.mxu0 %v114
    %359 = vmatpush.msra.mxu0 %v113
    %360 = vmatpush.msra.mxu0 %v112
    %361 = vmatpush.msra.mxu0 %v111
    %362 = vmatpush.msra.mxu0 %v110
    %363 = vmatpush.msra.mxu0 %v109
    %364 = vmatpush.msra.mxu0 %v108
    %365 = vmatpush.msra.mxu0 %v107
    %366 = vmatpush.msra.mxu0 %v106
    %367 = vmatmul.f32.gmra.mxu0 %v287
    %v368 = vpop.f32.mrf.mxu0
    %v369 = vadd.f32 %v349, %v368
    %370 = vdwg.mxu0
    %v371 = vtanh.pop %v369
    %372 = vmatpush.msra.mxu0 %v138
    %373 = vmatpush.msra.mxu0 %v137
    %374 = vmatpush.msra.mxu0 %v136
    %375 = vmatpush.msra.mxu0 %v135
    %376 = vmatpush.msra.mxu0 %v134
    %377 = vmatpush.msra.mxu0 %v133
    %378 = vmatpush.msra.mxu0 %v132
    %379 = vmatpush.msra.mxu0 %v131
    %380 = vmatpush.msra.mxu0 %v130
    %381 = vmatpush.msra.mxu0 %v129
    %382 = vmatpush.msra.mxu0 %v128
    %383 = vmatpush.msra.mxu0 %v127
    %384 = vmatpush.msra.mxu0 %v126
    %385 = vmatpush.msra.mxu0 %v125
    %386 = vmatpush.msra.mxu0 %v124
    %387 = vmatpush.msra.mxu0 %v123
    %388 = vmatmul.f32.gmra.mxu0 %v371
    %v389 = vpop.f32.mrf.mxu0
    %v390 = vadd.f32 %v202, %v389
    %391 = vdwg.mxu0
    %392 = vmatpush.msra.mxu0 %v154
    %393 = vmatpush.msra.mxu0 %v153
    %394 = vmatpush.msra.mxu0 %v152
    %395 = vmatpush.msra.mxu0 %v151
    %396 = vmatpush.msra.mxu0 %v150
    %397 = vmatpush.msra.mxu0 %v149
    %398 = vmatpush.msra.mxu0 %v148
    %399 = vmatpush.msra.mxu0 %v147
    %400 = vmatpush.msra.mxu0 %v146
    %401 = vmatpush.msra.mxu0 %v145
    %402 = vmatpush.msra.mxu0 %v144
    %403 = vmatpush.msra.mxu0 %v143
    %404 = vmatpush.msra.mxu0 %v142
    %405 = vmatpush.msra.mxu0 %v141
    %406 = vmatpush.msra.mxu0 %v140
    %407 = vmatpush.msra.mxu0 %v139
    %408 = vmatmul.f32.gmra.mxu0 %v328
    %v409 = vpop.f32.mrf.mxu0
    %v410 = vadd.f32 %v390, %v409
    %411 = vdwg.mxu0
    %v412 = vtanh.pop %v410
    %s413 = scalar_lea.vmem [#allocation2], 6
    %v414 = vld [vmem:[%s413] sm:$0x3]
    %415 = vmatpush.msra.mxu0 %v105
    %416 = vmatpush.msra.mxu0 %v104
    %417 = vmatpush.msra.mxu0 %v103
    %418 = vmatpush.msra.mxu0 %v102
    %419 = vmatpush.msra.mxu0 %v101
    %420 = vmatpush.msra.mxu0 %v100
    %421 = vmatpush.msra.mxu0 %v99
    %422 = vmatpush.msra.mxu0 %v98
    %423 = vmatpush.msra.mxu0 %v97
    %424 = vmatpush.msra.mxu0 %v96
    %425 = vmatpush.msra.mxu0 %v95
    %426 = vmatpush.msra.mxu0 %v94
    %427 = vmatpush.msra.mxu0 %v93
    %428 = vmatpush.msra.mxu0 %v92
    %429 = vmatpush.msra.mxu0 %v91
    %430 = vmatpush.msra.mxu0 %v90
    %431 = vmatmul.f32.gmra.mxu0 %v414
    %v432 = vpop.f32.mrf.mxu0
    %v433 = vadd.f32 %v158, %v432
    %434 = vdwg.mxu0
    %435 = vmatpush.msra.mxu0 %v121
    %436 = vmatpush.msra.mxu0 %v120
    %437 = vmatpush.msra.mxu0 %v119
    %438 = vmatpush.msra.mxu0 %v118
    %439 = vmatpush.msra.mxu0 %v117
    %440 = vmatpush.msra.mxu0 %v116
    %441 = vmatpush.msra.mxu0 %v115
    %442 = vmatpush.msra.mxu0 %v114
    %443 = vmatpush.msra.mxu0 %v113
    %444 = vmatpush.msra.mxu0 %v112
    %445 = vmatpush.msra.mxu0 %v111
    %446 = vmatpush.msra.mxu0 %v110
    %447 = vmatpush.msra.mxu0 %v109
    %448 = vmatpush.msra.mxu0 %v108
    %449 = vmatpush.msra.mxu0 %v107
    %450 = vmatpush.msra.mxu0 %v106
    %451 = vmatmul.f32.gmra.mxu0 %v371
    %v452 = vpop.f32.mrf.mxu0
    %v453 = vadd.f32 %v433, %v452
    %454 = vdwg.mxu0
    %v455 = vtanh.pop %v453
    %456 = vmatpush.msra.mxu0 %v138
    %457 = vmatpush.msra.mxu0 %v137
    %458 = vmatpush.msra.mxu0 %v136
    %459 = vmatpush.msra.mxu0 %v135
    %460 = vmatpush.msra.mxu0 %v134
    %461 = vmatpush.msra.mxu0 %v133
    %462 = vmatpush.msra.mxu0 %v132
    %463 = vmatpush.msra.mxu0 %v131
    %464 = vmatpush.msra.mxu0 %v130
    %465 = vmatpush.msra.mxu0 %v129
    %466 = vmatpush.msra.mxu0 %v128
    %467 = vmatpush.msra.mxu0 %v127
    %468 = vmatpush.msra.mxu0 %v126
    %469 = vmatpush.msra.mxu0 %v125
    %470 = vmatpush.msra.mxu0 %v124
    %471 = vmatpush.msra.mxu0 %v123
    %472 = vmatmul.f32.gmra.mxu0 %v455
    %v473 = vpop.f32.mrf.mxu0
    %v474 = vadd.f32 %v202, %v473
    %475 = vdwg.mxu0
    %476 = vmatpush.msra.mxu0 %v154
    %477 = vmatpush.msra.mxu0 %v153
    %478 = vmatpush.msra.mxu0 %v152
    %479 = vmatpush.msra.mxu0 %v151
    %480 = vmatpush.msra.mxu0 %v150
    %481 = vmatpush.msra.mxu0 %v149
    %482 = vmatpush.msra.mxu0 %v148
    %483 = vmatpush.msra.mxu0 %v147
    %484 = vmatpush.msra.mxu0 %v146
    %485 = vmatpush.msra.mxu0 %v145
    %486 = vmatpush.msra.mxu0 %v144
    %487 = vmatpush.msra.mxu0 %v143
    %488 = vmatpush.msra.mxu0 %v142
    %489 = vmatpush.msra.mxu0 %v141
    %490 = vmatpush.msra.mxu0 %v140
    %491 = vmatpush.msra.mxu0 %v139
    %492 = vmatmul.f32.gmra.mxu0 %v412
    %v493 = vpop.f32.mrf.mxu0
    %v494 = vadd.f32 %v474, %v493
    %495 = vdwg.mxu0
    %v496 = vtanh.pop %v494
    %s497 = scalar_lea.vmem [#allocation2], 8
    %v498 = vld [vmem:[%s497] sm:$0x3]
    %499 = vmatpush.msra.mxu0 %v105
    %500 = vmatpush.msra.mxu0 %v104
    %501 = vmatpush.msra.mxu0 %v103
    %502 = vmatpush.msra.mxu0 %v102
    %503 = vmatpush.msra.mxu0 %v101
    %504 = vmatpush.msra.mxu0 %v100
    %505 = vmatpush.msra.mxu0 %v99
    %506 = vmatpush.msra.mxu0 %v98
    %507 = vmatpush.msra.mxu0 %v97
    %508 = vmatpush.msra.mxu0 %v96
    %509 = vmatpush.msra.mxu0 %v95
    %510 = vmatpush.msra.mxu0 %v94
    %511 = vmatpush.msra.mxu0 %v93
    %512 = vmatpush.msra.mxu0 %v92
    %513 = vmatpush.msra.mxu0 %v91
    %514 = vmatpush.msra.mxu0 %v90
    %515 = vmatmul.f32.gmra.mxu0 %v498
    %v516 = vpop.f32.mrf.mxu0
    %v517 = vadd.f32 %v158, %v516
    %518 = vdwg.mxu0
    %519 = vmatpush.msra.mxu0 %v121
    %520 = vmatpush.msra.mxu0 %v120
    %521 = vmatpush.msra.mxu0 %v119
    %522 = vmatpush.msra.mxu0 %v118
    %523 = vmatpush.msra.mxu0 %v117
    %524 = vmatpush.msra.mxu0 %v116
    %525 = vmatpush.msra.mxu0 %v115
    %526 = vmatpush.msra.mxu0 %v114
    %527 = vmatpush.msra.mxu0 %v113
    %528 = vmatpush.msra.mxu0 %v112
    %529 = vmatpush.msra.mxu0 %v111
    %530 = vmatpush.msra.mxu0 %v110
    %531 = vmatpush.msra.mxu0 %v109
    %532 = vmatpush.msra.mxu0 %v108
    %533 = vmatpush.msra.mxu0 %v107
    %534 = vmatpush.msra.mxu0 %v106
    %535 = vmatmul.f32.gmra.mxu0 %v455
    %v536 = vpop.f32.mrf.mxu0
    %v537 = vadd.f32 %v517, %v536
    %538 = vdwg.mxu0
    %v539 = vtanh.pop %v537
    %540 = vmatpush.msra.mxu0 %v138
    %541 = vmatpush.msra.mxu0 %v137
    %542 = vmatpush.msra.mxu0 %v136
    %543 = vmatpush.msra.mxu0 %v135
    %544 = vmatpush.msra.mxu0 %v134
    %545 = vmatpush.msra.mxu0 %v133
    %546 = vmatpush.msra.mxu0 %v132
    %547 = vmatpush.msra.mxu0 %v131
    %548 = vmatpush.msra.mxu0 %v130
    %549 = vmatpush.msra.mxu0 %v129
    %550 = vmatpush.msra.mxu0 %v128
    %551 = vmatpush.msra.mxu0 %v127
    %552 = vmatpush.msra.mxu0 %v126
    %553 = vmatpush.msra.mxu0 %v125
    %554 = vmatpush.msra.mxu0 %v124
    %555 = vmatpush.msra.mxu0 %v123
    %556 = vmatmul.f32.gmra.mxu0 %v539
    %v557 = vpop.f32.mrf.mxu0
    %v558 = vadd.f32 %v202, %v557
    %559 = vdwg.mxu0
    %560 = vmatpush.msra.mxu0 %v154
    %561 = vmatpush.msra.mxu0 %v153
    %562 = vmatpush.msra.mxu0 %v152
    %563 = vmatpush.msra.mxu0 %v151
    %564 = vmatpush.msra.mxu0 %v150
    %565 = vmatpush.msra.mxu0 %v149
    %566 = vmatpush.msra.mxu0 %v148
    %567 = vmatpush.msra.mxu0 %v147
    %568 = vmatpush.msra.mxu0 %v146
    %569 = vmatpush.msra.mxu0 %v145
    %570 = vmatpush.msra.mxu0 %v144
    %571 = vmatpush.msra.mxu0 %v143
    %572 = vmatpush.msra.mxu0 %v142
    %573 = vmatpush.msra.mxu0 %v141
    %574 = vmatpush.msra.mxu0 %v140
    %575 = vmatpush.msra.mxu0 %v139
    %576 = vmatmul.f32.gmra.mxu0 %v496
    %v577 = vpop.f32.mrf.mxu0
    %v578 = vadd.f32 %v558, %v577
    %579 = vdwg.mxu0
    %v580 = vtanh.pop %v578
    %s581 = scalar_lea.vmem [#allocation2], 10
    %v582 = vld [vmem:[%s581] sm:$0x3]
    %583 = vmatpush.msra.mxu0 %v105
    %584 = vmatpush.msra.mxu0 %v104
    %585 = vmatpush.msra.mxu0 %v103
    %586 = vmatpush.msra.mxu0 %v102
    %587 = vmatpush.msra.mxu0 %v101
    %588 = vmatpush.msra.mxu0 %v100
    %589 = vmatpush.msra.mxu0 %v99
    %590 = vmatpush.msra.mxu0 %v98
    %591 = vmatpush.msra.mxu0 %v97
    %592 = vmatpush.msra.mxu0 %v96
    %593 = vmatpush.msra.mxu0 %v95
    %594 = vmatpush.msra.mxu0 %v94
    %595 = vmatpush.msra.mxu0 %v93
    %596 = vmatpush.msra.mxu0 %v92
    %597 = vmatpush.msra.mxu0 %v91
    %598 = vmatpush.msra.mxu0 %v90
    %599 = vmatmul.f32.gmra.mxu0 %v582
    %v600 = vpop.f32.mrf.mxu0
    %v601 = vadd.f32 %v158, %v600
    %602 = vdwg.mxu0
    %603 = vmatpush.msra.mxu0 %v121
    %604 = vmatpush.msra.mxu0 %v120
    %605 = vmatpush.msra.mxu0 %v119
    %606 = vmatpush.msra.mxu0 %v118
    %607 = vmatpush.msra.mxu0 %v117
    %608 = vmatpush.msra.mxu0 %v116
    %609 = vmatpush.msra.mxu0 %v115
    %610 = vmatpush.msra.mxu0 %v114
    %611 = vmatpush.msra.mxu0 %v113
    %612 = vmatpush.msra.mxu0 %v112
    %613 = vmatpush.msra.mxu0 %v111
    %614 = vmatpush.msra.mxu0 %v110
    %615 = vmatpush.msra.mxu0 %v109
    %616 = vmatpush.msra.mxu0 %v108
    %617 = vmatpush.msra.mxu0 %v107
    %618 = vmatpush.msra.mxu0 %v106
    %619 = vmatmul.f32.gmra.mxu0 %v539
    %v620 = vpop.f32.mrf.mxu0
    %v621 = vadd.f32 %v601, %v620
    %622 = vdwg.mxu0
    %v623 = vtanh.pop %v621
    %624 = vmatpush.msra.mxu0 %v138
    %625 = vmatpush.msra.mxu0 %v137
    %626 = vmatpush.msra.mxu0 %v136
    %627 = vmatpush.msra.mxu0 %v135
    %628 = vmatpush.msra.mxu0 %v134
    %629 = vmatpush.msra.mxu0 %v133
    %630 = vmatpush.msra.mxu0 %v132
    %631 = vmatpush.msra.mxu0 %v131
    %632 = vmatpush.msra.mxu0 %v130
    %633 = vmatpush.msra.mxu0 %v129
    %634 = vmatpush.msra.mxu0 %v128
    %635 = vmatpush.msra.mxu0 %v127
    %636 = vmatpush.msra.mxu0 %v126
    %637 = vmatpush.msra.mxu0 %v125
    %638 = vmatpush.msra.mxu0 %v124
    %639 = vmatpush.msra.mxu0 %v123
    %640 = vmatmul.f32.gmra.mxu0 %v623
    %v641 = vpop.f32.mrf.mxu0
    %v642 = vadd.f32 %v202, %v641
    %643 = vdwg.mxu0
    %644 = vmatpush.msra.mxu0 %v154
    %645 = vmatpush.msra.mxu0 %v153
    %646 = vmatpush.msra.mxu0 %v152
    %647 = vmatpush.msra.mxu0 %v151
    %648 = vmatpush.msra.mxu0 %v150
    %649 = vmatpush.msra.mxu0 %v149
    %650 = vmatpush.msra.mxu0 %v148
    %651 = vmatpush.msra.mxu0 %v147
    %652 = vmatpush.msra.mxu0 %v146
    %653 = vmatpush.msra.mxu0 %v145
    %654 = vmatpush.msra.mxu0 %v144
    %655 = vmatpush.msra.mxu0 %v143
    %656 = vmatpush.msra.mxu0 %v142
    %657 = vmatpush.msra.mxu0 %v141
    %658 = vmatpush.msra.mxu0 %v140
    %659 = vmatpush.msra.mxu0 %v139
    %660 = vmatmul.f32.gmra.mxu0 %v580
    %v661 = vpop.f32.mrf.mxu0
    %v662 = vadd.f32 %v642, %v661
    %663 = vdwg.mxu0
    %v664 = vtanh.pop %v662
    %s665 = scalar_lea.vmem [#allocation2], 12
    %v666 = vld [vmem:[%s665] sm:$0x3]
    %667 = vmatpush.msra.mxu0 %v105
    %668 = vmatpush.msra.mxu0 %v104
    %669 = vmatpush.msra.mxu0 %v103
    %670 = vmatpush.msra.mxu0 %v102
    %671 = vmatpush.msra.mxu0 %v101
    %672 = vmatpush.msra.mxu0 %v100
    %673 = vmatpush.msra.mxu0 %v99
    %674 = vmatpush.msra.mxu0 %v98
    %675 = vmatpush.msra.mxu0 %v97
    %676 = vmatpush.msra.mxu0 %v96
    %677 = vmatpush.msra.mxu0 %v95
    %678 = vmatpush.msra.mxu0 %v94
    %679 = vmatpush.msra.mxu0 %v93
    %680 = vmatpush.msra.mxu0 %v92
    %681 = vmatpush.msra.mxu0 %v91
    %682 = vmatpush.msra.mxu0 %v90
    %683 = vmatmul.f32.gmra.mxu0 %v666
    %v684 = vpop.f32.mrf.mxu0
    %v685 = vadd.f32 %v158, %v684
    %686 = vdwg.mxu0
    %687 = vmatpush.msra.mxu0 %v121
    %688 = vmatpush.msra.mxu0 %v120
    %689 = vmatpush.msra.mxu0 %v119
    %690 = vmatpush.msra.mxu0 %v118
    %691 = vmatpush.msra.mxu0 %v117
    %692 = vmatpush.msra.mxu0 %v116
    %693 = vmatpush.msra.mxu0 %v115
    %694 = vmatpush.msra.mxu0 %v114
    %695 = vmatpush.msra.mxu0 %v113
    %696 = vmatpush.msra.mxu0 %v112
    %697 = vmatpush.msra.mxu0 %v111
    %698 = vmatpush.msra.mxu0 %v110
    %699 = vmatpush.msra.mxu0 %v109
    %700 = vmatpush.msra.mxu0 %v108
    %701 = vmatpush.msra.mxu0 %v107
    %702 = vmatpush.msra.mxu0 %v106
    %703 = vmatmul.f32.gmra.mxu0 %v623
    %v704 = vpop.f32.mrf.mxu0
    %v705 = vadd.f32 %v685, %v704
    %706 = vdwg.mxu0
    %v707 = vtanh.pop %v705
    %708 = vmatpush.msra.mxu0 %v138
    %709 = vmatpush.msra.mxu0 %v137
    %710 = vmatpush.msra.mxu0 %v136
    %711 = vmatpush.msra.mxu0 %v135
    %712 = vmatpush.msra.mxu0 %v134
    %713 = vmatpush.msra.mxu0 %v133
    %714 = vmatpush.msra.mxu0 %v132
    %715 = vmatpush.msra.mxu0 %v131
    %716 = vmatpush.msra.mxu0 %v130
    %717 = vmatpush.msra.mxu0 %v129
    %718 = vmatpush.msra.mxu0 %v128
    %719 = vmatpush.msra.mxu0 %v127
    %720 = vmatpush.msra.mxu0 %v126
    %721 = vmatpush.msra.mxu0 %v125
    %722 = vmatpush.msra.mxu0 %v124
    %723 = vmatpush.msra.mxu0 %v123
    %724 = vmatmul.f32.gmra.mxu0 %v707
    %v725 = vpop.f32.mrf.mxu0
    %v726 = vadd.f32 %v202, %v725
    %727 = vdwg.mxu0
    %728 = vmatpush.msra.mxu0 %v154
    %729 = vmatpush.msra.mxu0 %v153
    %730 = vmatpush.msra.mxu0 %v152
    %731 = vmatpush.msra.mxu0 %v151
    %732 = vmatpush.msra.mxu0 %v150
    %733 = vmatpush.msra.mxu0 %v149
    %734 = vmatpush.msra.mxu0 %v148
    %735 = vmatpush.msra.mxu0 %v147
    %736 = vmatpush.msra.mxu0 %v146
    %737 = vmatpush.msra.mxu0 %v145
    %738 = vmatpush.msra.mxu0 %v144
    %739 = vmatpush.msra.mxu0 %v143
    %740 = vmatpush.msra.mxu0 %v142
    %741 = vmatpush.msra.mxu0 %v141
    %742 = vmatpush.msra.mxu0 %v140
    %743 = vmatpush.msra.mxu0 %v139
    %744 = vmatmul.f32.gmra.mxu0 %v664
    %v745 = vpop.f32.mrf.mxu0
    %v746 = vadd.f32 %v726, %v745
    %747 = vdwg.mxu0
    %v748 = vtanh.pop %v746
    %s749 = scalar_lea.vmem [#allocation2], 14
    %v750 = vld [vmem:[%s749] sm:$0x3]
    %751 = vmatpush.msra.mxu0 %v105
    %752 = vmatpush.msra.mxu0 %v104
    %753 = vmatpush.msra.mxu0 %v103
    %754 = vmatpush.msra.mxu0 %v102
    %755 = vmatpush.msra.mxu0 %v101
    %756 = vmatpush.msra.mxu0 %v100
    %757 = vmatpush.msra.mxu0 %v99
    %758 = vmatpush.msra.mxu0 %v98
    %759 = vmatpush.msra.mxu0 %v97
    %760 = vmatpush.msra.mxu0 %v96
    %761 = vmatpush.msra.mxu0 %v95
    %762 = vmatpush.msra.mxu0 %v94
    %763 = vmatpush.msra.mxu0 %v93
    %764 = vmatpush.msra.mxu0 %v92
    %765 = vmatpush.msra.mxu0 %v91
    %766 = vmatpush.msra.mxu0 %v90
    %767 = vmatmul.f32.gmra.mxu0 %v750
    %v768 = vpop.f32.mrf.mxu0
    %v769 = vadd.f32 %v158, %v768
    %770 = vdwg.mxu0
    %771 = vmatpush.msra.mxu0 %v121
    %772 = vmatpush.msra.mxu0 %v120
    %773 = vmatpush.msra.mxu0 %v119
    %774 = vmatpush.msra.mxu0 %v118
    %775 = vmatpush.msra.mxu0 %v117
    %776 = vmatpush.msra.mxu0 %v116
    %777 = vmatpush.msra.mxu0 %v115
    %778 = vmatpush.msra.mxu0 %v114
    %779 = vmatpush.msra.mxu0 %v113
    %780 = vmatpush.msra.mxu0 %v112
    %781 = vmatpush.msra.mxu0 %v111
    %782 = vmatpush.msra.mxu0 %v110
    %783 = vmatpush.msra.mxu0 %v109
    %784 = vmatpush.msra.mxu0 %v108
    %785 = vmatpush.msra.mxu0 %v107
    %786 = vmatpush.msra.mxu0 %v106
    %787 = vmatmul.f32.gmra.mxu0 %v707
    %v788 = vpop.f32.mrf.mxu0
    %v789 = vadd.f32 %v769, %v788
    %790 = vdwg.mxu0
    %v791 = vtanh.pop %v789
    %792 = vmatpush.msra.mxu0 %v138
    %793 = vmatpush.msra.mxu0 %v137
    %794 = vmatpush.msra.mxu0 %v136
    %795 = vmatpush.msra.mxu0 %v135
    %796 = vmatpush.msra.mxu0 %v134
    %797 = vmatpush.msra.mxu0 %v133
    %798 = vmatpush.msra.mxu0 %v132
    %799 = vmatpush.msra.mxu0 %v131
    %800 = vmatpush.msra.mxu0 %v130
    %801 = vmatpush.msra.mxu0 %v129
    %802 = vmatpush.msra.mxu0 %v128
    %803 = vmatpush.msra.mxu0 %v127
    %804 = vmatpush.msra.mxu0 %v126
    %805 = vmatpush.msra.mxu0 %v125
    %806 = vmatpush.msra.mxu0 %v124
    %807 = vmatpush.msra.mxu0 %v123
    %808 = vmatmul.f32.gmra.mxu0 %v791
    %v809 = vpop.f32.mrf.mxu0
    %v810 = vadd.f32 %v202, %v809
    %811 = vdwg.mxu0
    %812 = vmatpush.msra.mxu0 %v154
    %813 = vmatpush.msra.mxu0 %v153
    %814 = vmatpush.msra.mxu0 %v152
    %815 = vmatpush.msra.mxu0 %v151
    %816 = vmatpush.msra.mxu0 %v150
    %817 = vmatpush.msra.mxu0 %v149
    %818 = vmatpush.msra.mxu0 %v148
    %819 = vmatpush.msra.mxu0 %v147
    %820 = vmatpush.msra.mxu0 %v146
    %821 = vmatpush.msra.mxu0 %v145
    %822 = vmatpush.msra.mxu0 %v144
    %823 = vmatpush.msra.mxu0 %v143
    %824 = vmatpush.msra.mxu0 %v142
    %825 = vmatpush.msra.mxu0 %v141
    %826 = vmatpush.msra.mxu0 %v140
    %827 = vmatpush.msra.mxu0 %v139
    %828 = vmatmul.f32.gmra.mxu0 %v748
    %v829 = vpop.f32.mrf.mxu0
    %v830 = vadd.f32 %v810, %v829
    %831 = vdwg.mxu0
    %v832 = vtanh.pop %v830
    %v833 = vld [vmem:[#allocation8] sm:$0xff]
    %v834 = vld [vmem:[#allocation8 + $0x8] sm:$0xff]
    %v835 = vld [vmem:[#allocation8 + $0x10] sm:$0xff]
    %v836 = vld [vmem:[#allocation8 + $0x18] sm:$0xff]
    %v837 = vld [vmem:[#allocation8 + $0x20] sm:$0xff]
    %v838 = vld [vmem:[#allocation8 + $0x28] sm:$0xff]
    %v839 = vld [vmem:[#allocation8 + $0x30] sm:$0xff]
    %v840 = vld [vmem:[#allocation8 + $0x38] sm:$0xff]
    %v841 = vld [vmem:[#allocation8 + $0x40] sm:$0xff]
    %v842 = vld [vmem:[#allocation8 + $0x48] sm:$0xff]
    %v843 = vld [vmem:[#allocation8 + $0x50] sm:$0xff]
    %v844 = vld [vmem:[#allocation8 + $0x58] sm:$0xff]
    %v845 = vld [vmem:[#allocation8 + $0x60] sm:$0xff]
    %v846 = vld [vmem:[#allocation8 + $0x68] sm:$0xff]
    %v847 = vld [vmem:[#allocation8 + $0x70] sm:$0xff]
    %v848 = vld [vmem:[#allocation8 + $0x78] sm:$0xff]
    %v849 = vld [vmem:[%s6] sm:$0x1]
    %v851 = vperm.slane %v849, 0
    %853 = vmatpush.msra.mxu0 %v848
    %854 = vmatpush.msra.mxu0 %v847
    %855 = vmatpush.msra.mxu0 %v846
    %856 = vmatpush.msra.mxu0 %v845
    %857 = vmatpush.msra.mxu0 %v844
    %858 = vmatpush.msra.mxu0 %v843
    %859 = vmatpush.msra.mxu0 %v842
    %860 = vmatpush.msra.mxu0 %v841
    %861 = vmatpush.msra.mxu0 %v840
    %862 = vmatpush.msra.mxu0 %v839
    %863 = vmatpush.msra.mxu0 %v838
    %864 = vmatpush.msra.mxu0 %v837
    %865 = vmatpush.msra.mxu0 %v836
    %866 = vmatpush.msra.mxu0 %v835
    %867 = vmatpush.msra.mxu0 %v834
    %868 = vmatpush.msra.mxu0 %v833
    %869 = vmatmul.f32.gmra.mxu0 %v832
    %v870 = vpop.f32.mrf.mxu0
    %v871 = vadd.f32 %v851, %v870
    %872 = vdwg.mxu0
    %873 = vst [vmem:[#allocation10] sm:$0x3] %v871
    // Predicated region
    $region46: #{tpu_custom_call.1} parent=1 // pred_check
      _
    $region47: #{tpu_custom_call.1} parent=1 // pred_check_branch
      %875 = sbr.rel (0) target = $region49
    $region48: #{tpu_custom_call.1} parent=1 // pred_region
      %877 = vsyncadd [#allocation4], 0
      %s879 = sshll.u32 [#allocation10], 4
      %s880 = int_to_ptr.vmem [resolvable:$true] %s879
      %s881 = sshll.u32 %s7, 4
      %s882 = int_to_ptr.hbm [resolvable:$true] %s881
      %884 = dma.vmem_to_hbm [thread:$0]  %s880, 32, %s882, [#allocation4]
    $region49: #{tpu_custom_call.1} parent=1 // pred_fallthru
      _
    // Predicated region
    $region50: #{tpu_custom_call.1} parent=1 // pred_check
      _
    $region51: #{tpu_custom_call.1} parent=1 // pred_check_branch
      %886 = sbr.rel (0) target = $region53
    $region52: #{tpu_custom_call.1} parent=1 // pred_region
      %888 = dma.done [#allocation4], 32
    $region53: #{tpu_custom_call.1} parent=1 // pred_fallthru
      _
    %889 = vsyncpa [#allocation3], 1
    %890 = vsyncpa [#allocation6], 1
    %891 = vsyncpa [#allocation9], 1
    %892 = vsyncpa [#allocation4], 1

</llo_original>
